<compile_context>
chip_gen: v7x
topology: tpu7x:2x2x1
jax: 0.10.0
libtpu: 0.0.40
codegen_flags: <defaults>
</compile_context>

<pallas_src>
import functools

import jax
import jax.numpy as jnp
from jax import lax
from jax.experimental import pallas as pl
from jax.experimental.pallas import tpu as pltpu


def _pick_query_block(batch, hw, m_pad, bytes_budget=24 * 1024 * 1024):
    """Largest divisor of `batch` (<=8) whose per-step working set fits the budget
    and that still leaves >=2 grid steps (v7x megacore balance)."""
    per_query = hw * m_pad * 4 * 3  # ~3 live f32 copies of one class's similarities
    max_tb = max(1, bytes_budget // max(per_query, 1))
    best = 1
    for d in range(1, min(8, batch) + 1):
        if batch % d == 0 and d <= max_tb and batch // d >= 2:
            best = d
    return best


def _img2class_kernel(q_ref, s_ref, out_ref, *, neighbor_k, num_classes, m, m_pad,
                      classes_per_dot, tb, hw):
    # q_ref:   (TB, HW, C) f32 query block
    # s_ref:   (C, W*M_pad) pre-normalized support slab (mxu dtype), VMEM-resident
    # out_ref: (TB, 1, W)  f32 per-query output rows
    q = q_ref[...]
    c_dim = q.shape[-1]
    rows = tb * hw
    q = q.reshape(rows, c_dim)

    # L2-normalize query descriptors in f32 (rsqrt -> EUP), cast only for the MXU.
    qn = (q * lax.rsqrt(jnp.sum(q * q, axis=-1, keepdims=True))).astype(s_ref.dtype)

    m_iota = lax.broadcasted_iota(jnp.int32, (rows, m_pad), 1)
    class_lane = lax.broadcasted_iota(jnp.int32, (rows, num_classes), 1)
    acc = jnp.zeros((rows, num_classes), jnp.float32)
    neg_inf = float("-inf")

    # Static loop over class groups: one MXU matmul per group (lane width
    # g*M_pad, 128-aligned), consumed directly -> no full similarity scratch.
    for c0 in range(0, num_classes, classes_per_dot):
        g = min(classes_per_dot, num_classes - c0)
        s_grp = s_ref[:, c0 * m_pad:(c0 + g) * m_pad]               # (C, g*M_pad)
        sim_grp = jnp.dot(qn, s_grp, preferred_element_type=jnp.float32)

        for jg in range(g):
            j = c0 + jg
            vals = sim_grp[:, jg * m_pad:(jg + 1) * m_pad]          # (rows, M_pad) aligned
            if m_pad > m:
                vals = jnp.where(m_iota >= m, neg_inf, vals)        # mask pad lanes

            # Exact top-k: k passes of row-max + first-occurrence masking
            # (matches torch.topk duplicate-tie semantics). Values stay live
            # straight out of the matmul; no VMEM round-trip of a big scratch.
            tot = jnp.zeros((rows, 1), jnp.float32)
            for t in range(neighbor_k):
                row_max = jnp.max(vals, axis=-1, keepdims=True)     # (rows, 1)
                tot = tot + row_max
                if t + 1 < neighbor_k:                              # skip mask on last pass
                    first = jnp.min(
                        jnp.where(vals == row_max, m_iota, m_pad),
                        axis=-1, keepdims=True)
                    vals = jnp.where(m_iota == first, neg_inf, vals)

            # Lane-scatter the per-row class total into the (rows, W) accumulator
            # (cheap VPU select; no per-k scalar reductions).
            acc = acc + jnp.where(class_lane == j, tot, 0.0)

    # One sublane reduction per query at the very end.
    for b in range(tb):
        out_ref[b] = jnp.sum(acc[b * hw:(b + 1) * hw], axis=0, keepdims=True)  # (1, W)


def img_to_class_metric(x1, x2, neighbor_k, *, mxu_dtype=jnp.bfloat16):
    """x1: (B, C, h, w); x2: list of W arrays (C, M) or stacked (W, C, M) -> (B, W) f32."""
    if isinstance(x2, (list, tuple)):
        x2 = jnp.stack([jnp.asarray(s) for s in x2], axis=0)
    B, C, h, w = x1.shape
    HW = h * w
    W, C2, M = x2.shape
    assert C == C2, "channel mismatch between queries and supports"
    assert 1 <= neighbor_k <= M, "neighbor_k must be <= number of support descriptors"

    # Pad each class's descriptor count to a lane-friendly width (>=128, mult of 128).
    M_pad = max(128, ((M + 127) // 128) * 128)

    # Queries: NCHW -> (B, HW, C) f32 descriptors (normalized inside the kernel).
    q = jnp.transpose(x1.reshape(B, C, HW).astype(jnp.float32), (0, 2, 1))

    # Supports: one-time column L2-normalization in plain XLA, pad M -> M_pad,
    # lay out as a single (C, W*M_pad) slab in the MXU dtype.
    s = x2.astype(jnp.float32)
    s = s * lax.rsqrt(jnp.sum(s * s, axis=1, keepdims=True))        # (W, C, M)
    if M_pad > M:
        s = jnp.pad(s, ((0, 0), (0, 0), (0, M_pad - M)))
    slab = jnp.transpose(s, (1, 0, 2)).reshape(C, W * M_pad).astype(mxu_dtype)

    # Group classes per matmul so the MXU lane (N) dim is >=~512 when M_pad is small.
    classes_per_dot = max(1, min(W, 512 // M_pad))

    TB = _pick_query_block(B, HW, M_pad)
    grid = (B // TB,)

    kernel = functools.partial(
        _img2class_kernel,
        neighbor_k=neighbor_k, num_classes=W, m=M, m_pad=M_pad,
        classes_per_dot=classes_per_dot, tb=TB, hw=HW)

    out = pl.pallas_call(
        kernel,
        out_shape=jax.ShapeDtypeStruct((B, 1, W), jnp.float32),
        grid=grid,
        in_specs=[
            pl.BlockSpec((TB, HW, C), lambda i: (i, 0, 0)),
            pl.BlockSpec((C, W * M_pad), lambda i: (0, 0)),   # resident support slab
        ],
        out_specs=pl.BlockSpec((TB, 1, W), lambda i: (i, 0, 0)),
        compiler_params=pltpu.CompilerParams(
            dimension_semantics=("parallel",),       # queries independent -> megacore
            vmem_limit_bytes=40 * 1024 * 1024,       # sized for v7x's 64 MiB/TC
        ),
    )(q, slab)
    return out.reshape(B, W)


def _reference(x1, x2_stacked, neighbor_k):
    B, C, h, w = x1.shape
    q = jnp.transpose(x1.reshape(B, C, -1), (0, 2, 1))
    q = q / jnp.linalg.norm(q, axis=-1, keepdims=True)
    s = x2_stacked / jnp.linalg.norm(x2_stacked, axis=1, keepdims=True)
    inner = jnp.einsum("bqc,wcm->bwqm", q, s, precision=lax.Precision.HIGHEST)
    topv = lax.top_k(inner, neighbor_k)[0]
    return jnp.sum(topv, axis=(-1, -2))


if __name__ == "__main__":
    # Small deterministic example consistent with the module:
    #   B=2 queries, C=32 channels, 4x4 spatial (16 descriptors / query),
    #   W=3 classes with M=32 support descriptors each, neighbor_k=3.
    key = jax.random.PRNGKey(0)
    k1, k2 = jax.random.split(key)
    B, C, h, w = 2, 32, 4, 4
    W, M = 3, 32
    neighbor_k = 3

    x1 = jax.random.normal(k1, (B, C, h, w), dtype=jnp.float32)
    x2_stacked = jax.random.normal(k2, (W, C, M), dtype=jnp.float32)
    x2_list = [x2_stacked[j] for j in range(W)]   # module's forward takes a list

    ref = _reference(x1, x2_stacked, neighbor_k)

    # Default (bf16 MXU operands, f32 accumulate / top-k math).
    out = jax.block_until_ready(img_to_class_metric(x1, x2_list, neighbor_k))
    assert out.shape == (B, W)
    assert jnp.allclose(out, ref, atol=2e-2, rtol=2e-2), (out, ref)

    # Full-f32 MXU path validates tightly against the HIGHEST-precision reference.
    out_f32 = jax.block_until_ready(
        img_to_class_metric(x1, x2_list, neighbor_k, mxu_dtype=jnp.float32))
    assert jnp.allclose(out_f32, ref, atol=1e-3, rtol=1e-3), (out_f32, ref)

    print("KERNEL_OK")
</pallas_src>

<mosaic_0001>
module attributes {stable_mosaic.version = 11 : i64} {
  func.func @_img2class_kernel(%arg0: i32, %arg1: memref<1x16x32xf32, #tpu.memory_space<vmem>>, %arg2: memref<32x384xbf16, #tpu.memory_space<vmem>>, %arg3: memref<1x1x3xf32, #tpu.memory_space<vmem>>) attributes {dimension_semantics = [#tpu.dimension_semantics<parallel>], iteration_bounds = array<i64: 2>, scalar_prefetch = 0 : i64, scratch_operands = 0 : i64, tpu.core_type = #tpu.core_type<tc>, window_params = [{transform_indices = @transform_0, window_bounds = array<i64: 1, 16, 32>}, {pipeline_mode = #tpu.pipeline_mode<synchronous>, transform_indices = @transform_1, window_bounds = array<i64: 32, 384>}, {transform_indices = @transform_2, window_bounds = array<i64: 1, 1, 3>}]} {
    %c0 = arith.constant 0 : index
    %c0_0 = arith.constant 0 : index
    %c0_1 = arith.constant 0 : index
    %0 = vector.load %arg1[%c0, %c0_0, %c0_1] : memref<1x16x32xf32, #tpu.memory_space<vmem>>, vector<1x16x32xf32>
    %1 = vector.shape_cast %0 : vector<1x16x32xf32> to vector<16x32xf32>
    %2 = arith.mulf %1, %1 : vector<16x32xf32>
    %cst = arith.constant dense<0.000000e+00> : vector<16xf32>
    %3 = vector.multi_reduction <add>, %2, %cst [1] : vector<16x32xf32> to vector<16xf32>
    %4 = vector.shape_cast %3 : vector<16xf32> to vector<16x1xf32>
    %5 = math.rsqrt %4 : vector<16x1xf32>
    %6 = vector.broadcast %5 : vector<16x1xf32> to vector<16x32xf32>
    %7 = arith.mulf %1, %6 : vector<16x32xf32>
    %8 = arith.truncf %7 : vector<16x32xf32> to vector<16x32xbf16>
    %9 = tpu.iota {dimensions = array<i32: 1>} : vector<16x128xi32>
    %10 = tpu.iota {dimensions = array<i32: 1>} : vector<16x3xi32>
    %cst_2 = arith.constant 0.000000e+00 : f32
    %11 = vector.broadcast %cst_2 : f32 to vector<16x3xf32>
    %c0_3 = arith.constant 0 : index
    %c0_4 = arith.constant 0 : index
    %12 = vector.load %arg2[%c0_3, %c0_4] : memref<32x384xbf16, #tpu.memory_space<vmem>>, vector<32x384xbf16>
    %cst_5 = arith.constant dense<0.000000e+00> : vector<16x384xf32>
    %13 = tpu.matmul %8, %12, %cst_5 {dimension_numbers = #tpu.dot_dimension_numbers<[1], [0], [0], [1], [0, 0, 1, 1], [], []>} : vector<16x32xbf16>, vector<32x384xbf16>, vector<16x384xf32> -> vector<16x384xf32>
    %14 = vector.extract_strided_slice %13 {offsets = [0, 0], sizes = [16, 128], strides = [1, 1]} : vector<16x384xf32> to vector<16x128xf32>
    %c32_i32 = arith.constant 32 : i32
    %15 = vector.broadcast %c32_i32 : i32 to vector<16x128xi32>
    %16 = arith.cmpi sge, %9, %15 : vector<16x128xi32>
    %cst_6 = arith.constant 0xFF800000 : f32
    %17 = vector.broadcast %cst_6 : f32 to vector<16x128xf32>
    %18 = arith.select %16, %17, %14 : vector<16x128xi1>, vector<16x128xf32>
    %cst_7 = arith.constant 0.000000e+00 : f32
    %19 = vector.broadcast %cst_7 : f32 to vector<16x1xf32>
    %cst_8 = arith.constant dense<0xFF800000> : vector<16xf32>
    %20 = vector.multi_reduction <maximumf>, %18, %cst_8 [1] : vector<16x128xf32> to vector<16xf32>
    %21 = vector.shape_cast %20 : vector<16xf32> to vector<16x1xf32>
    %22 = arith.addf %19, %21 : vector<16x1xf32>
    %23 = vector.broadcast %21 : vector<16x1xf32> to vector<16x128xf32>
    %24 = arith.cmpf oeq, %18, %23 : vector<16x128xf32>
    %c128_i32 = arith.constant 128 : i32
    %25 = vector.broadcast %c128_i32 : i32 to vector<16x128xi32>
    %26 = arith.select %24, %9, %25 : vector<16x128xi1>, vector<16x128xi32>
    %cst_9 = arith.constant dense<2147483647> : vector<16xi32>
    %27 = vector.multi_reduction <minsi>, %26, %cst_9 [1] : vector<16x128xi32> to vector<16xi32>
    %28 = vector.shape_cast %27 : vector<16xi32> to vector<16x1xi32>
    %29 = vector.broadcast %28 : vector<16x1xi32> to vector<16x128xi32>
    %30 = arith.cmpi eq, %9, %29 : vector<16x128xi32>
    %cst_10 = arith.constant 0xFF800000 : f32
    %31 = vector.broadcast %cst_10 : f32 to vector<16x128xf32>
    %32 = arith.select %30, %31, %18 : vector<16x128xi1>, vector<16x128xf32>
    %cst_11 = arith.constant dense<0xFF800000> : vector<16xf32>
    %33 = vector.multi_reduction <maximumf>, %32, %cst_11 [1] : vector<16x128xf32> to vector<16xf32>
    %34 = vector.shape_cast %33 : vector<16xf32> to vector<16x1xf32>
    %35 = arith.addf %22, %34 : vector<16x1xf32>
    %36 = vector.broadcast %34 : vector<16x1xf32> to vector<16x128xf32>
    %37 = arith.cmpf oeq, %32, %36 : vector<16x128xf32>
    %c128_i32_12 = arith.constant 128 : i32
    %38 = vector.broadcast %c128_i32_12 : i32 to vector<16x128xi32>
    %39 = arith.select %37, %9, %38 : vector<16x128xi1>, vector<16x128xi32>
    %cst_13 = arith.constant dense<2147483647> : vector<16xi32>
    %40 = vector.multi_reduction <minsi>, %39, %cst_13 [1] : vector<16x128xi32> to vector<16xi32>
    %41 = vector.shape_cast %40 : vector<16xi32> to vector<16x1xi32>
    %42 = vector.broadcast %41 : vector<16x1xi32> to vector<16x128xi32>
    %43 = arith.cmpi eq, %9, %42 : vector<16x128xi32>
    %cst_14 = arith.constant 0xFF800000 : f32
    %44 = vector.broadcast %cst_14 : f32 to vector<16x128xf32>
    %45 = arith.select %43, %44, %32 : vector<16x128xi1>, vector<16x128xf32>
    %cst_15 = arith.constant dense<0xFF800000> : vector<16xf32>
    %46 = vector.multi_reduction <maximumf>, %45, %cst_15 [1] : vector<16x128xf32> to vector<16xf32>
    %47 = vector.shape_cast %46 : vector<16xf32> to vector<16x1xf32>
    %48 = arith.addf %35, %47 : vector<16x1xf32>
    %c0_i32 = arith.constant 0 : i32
    %49 = vector.broadcast %c0_i32 : i32 to vector<16x3xi32>
    %50 = arith.cmpi eq, %10, %49 : vector<16x3xi32>
    %cst_16 = arith.constant 0.000000e+00 : f32
    %51 = vector.shape_cast %48 : vector<16x1xf32> to vector<16x1xf32>
    %52 = vector.broadcast %51 : vector<16x1xf32> to vector<16x3xf32>
    %53 = vector.broadcast %cst_16 : f32 to vector<16x3xf32>
    %54 = arith.select %50, %52, %53 : vector<16x3xi1>, vector<16x3xf32>
    %55 = arith.addf %11, %54 : vector<16x3xf32>
    %56 = vector.extract_strided_slice %13 {offsets = [0, 128], sizes = [16, 128], strides = [1, 1]} : vector<16x384xf32> to vector<16x128xf32>
    %c32_i32_17 = arith.constant 32 : i32
    %57 = vector.broadcast %c32_i32_17 : i32 to vector<16x128xi32>
    %58 = arith.cmpi sge, %9, %57 : vector<16x128xi32>
    %cst_18 = arith.constant 0xFF800000 : f32
    %59 = vector.broadcast %cst_18 : f32 to vector<16x128xf32>
    %60 = arith.select %58, %59, %56 : vector<16x128xi1>, vector<16x128xf32>
    %cst_19 = arith.constant 0.000000e+00 : f32
    %61 = vector.broadcast %cst_19 : f32 to vector<16x1xf32>
    %cst_20 = arith.constant dense<0xFF800000> : vector<16xf32>
    %62 = vector.multi_reduction <maximumf>, %60, %cst_20 [1] : vector<16x128xf32> to vector<16xf32>
    %63 = vector.shape_cast %62 : vector<16xf32> to vector<16x1xf32>
    %64 = arith.addf %61, %63 : vector<16x1xf32>
    %65 = vector.broadcast %63 : vector<16x1xf32> to vector<16x128xf32>
    %66 = arith.cmpf oeq, %60, %65 : vector<16x128xf32>
    %c128_i32_21 = arith.constant 128 : i32
    %67 = vector.broadcast %c128_i32_21 : i32 to vector<16x128xi32>
    %68 = arith.select %66, %9, %67 : vector<16x128xi1>, vector<16x128xi32>
    %cst_22 = arith.constant dense<2147483647> : vector<16xi32>
    %69 = vector.multi_reduction <minsi>, %68, %cst_22 [1] : vector<16x128xi32> to vector<16xi32>
    %70 = vector.shape_cast %69 : vector<16xi32> to vector<16x1xi32>
    %71 = vector.broadcast %70 : vector<16x1xi32> to vector<16x128xi32>
    %72 = arith.cmpi eq, %9, %71 : vector<16x128xi32>
    %cst_23 = arith.constant 0xFF800000 : f32
    %73 = vector.broadcast %cst_23 : f32 to vector<16x128xf32>
    %74 = arith.select %72, %73, %60 : vector<16x128xi1>, vector<16x128xf32>
    %cst_24 = arith.constant dense<0xFF800000> : vector<16xf32>
    %75 = vector.multi_reduction <maximumf>, %74, %cst_24 [1] : vector<16x128xf32> to vector<16xf32>
    %76 = vector.shape_cast %75 : vector<16xf32> to vector<16x1xf32>
    %77 = arith.addf %64, %76 : vector<16x1xf32>
    %78 = vector.broadcast %76 : vector<16x1xf32> to vector<16x128xf32>
    %79 = arith.cmpf oeq, %74, %78 : vector<16x128xf32>
    %c128_i32_25 = arith.constant 128 : i32
    %80 = vector.broadcast %c128_i32_25 : i32 to vector<16x128xi32>
    %81 = arith.select %79, %9, %80 : vector<16x128xi1>, vector<16x128xi32>
    %cst_26 = arith.constant dense<2147483647> : vector<16xi32>
    %82 = vector.multi_reduction <minsi>, %81, %cst_26 [1] : vector<16x128xi32> to vector<16xi32>
    %83 = vector.shape_cast %82 : vector<16xi32> to vector<16x1xi32>
    %84 = vector.broadcast %83 : vector<16x1xi32> to vector<16x128xi32>
    %85 = arith.cmpi eq, %9, %84 : vector<16x128xi32>
    %cst_27 = arith.constant 0xFF800000 : f32
    %86 = vector.broadcast %cst_27 : f32 to vector<16x128xf32>
    %87 = arith.select %85, %86, %74 : vector<16x128xi1>, vector<16x128xf32>
    %cst_28 = arith.constant dense<0xFF800000> : vector<16xf32>
    %88 = vector.multi_reduction <maximumf>, %87, %cst_28 [1] : vector<16x128xf32> to vector<16xf32>
    %89 = vector.shape_cast %88 : vector<16xf32> to vector<16x1xf32>
    %90 = arith.addf %77, %89 : vector<16x1xf32>
    %c1_i32 = arith.constant 1 : i32
    %91 = vector.broadcast %c1_i32 : i32 to vector<16x3xi32>
    %92 = arith.cmpi eq, %10, %91 : vector<16x3xi32>
    %cst_29 = arith.constant 0.000000e+00 : f32
    %93 = vector.shape_cast %90 : vector<16x1xf32> to vector<16x1xf32>
    %94 = vector.broadcast %93 : vector<16x1xf32> to vector<16x3xf32>
    %95 = vector.broadcast %cst_29 : f32 to vector<16x3xf32>
    %96 = arith.select %92, %94, %95 : vector<16x3xi1>, vector<16x3xf32>
    %97 = arith.addf %55, %96 : vector<16x3xf32>
    %98 = vector.extract_strided_slice %13 {offsets = [0, 256], sizes = [16, 128], strides = [1, 1]} : vector<16x384xf32> to vector<16x128xf32>
    %c32_i32_30 = arith.constant 32 : i32
    %99 = vector.broadcast %c32_i32_30 : i32 to vector<16x128xi32>
    %100 = arith.cmpi sge, %9, %99 : vector<16x128xi32>
    %cst_31 = arith.constant 0xFF800000 : f32
    %101 = vector.broadcast %cst_31 : f32 to vector<16x128xf32>
    %102 = arith.select %100, %101, %98 : vector<16x128xi1>, vector<16x128xf32>
    %cst_32 = arith.constant 0.000000e+00 : f32
    %103 = vector.broadcast %cst_32 : f32 to vector<16x1xf32>
    %cst_33 = arith.constant dense<0xFF800000> : vector<16xf32>
    %104 = vector.multi_reduction <maximumf>, %102, %cst_33 [1] : vector<16x128xf32> to vector<16xf32>
    %105 = vector.shape_cast %104 : vector<16xf32> to vector<16x1xf32>
    %106 = arith.addf %103, %105 : vector<16x1xf32>
    %107 = vector.broadcast %105 : vector<16x1xf32> to vector<16x128xf32>
    %108 = arith.cmpf oeq, %102, %107 : vector<16x128xf32>
    %c128_i32_34 = arith.constant 128 : i32
    %109 = vector.broadcast %c128_i32_34 : i32 to vector<16x128xi32>
    %110 = arith.select %108, %9, %109 : vector<16x128xi1>, vector<16x128xi32>
    %cst_35 = arith.constant dense<2147483647> : vector<16xi32>
    %111 = vector.multi_reduction <minsi>, %110, %cst_35 [1] : vector<16x128xi32> to vector<16xi32>
    %112 = vector.shape_cast %111 : vector<16xi32> to vector<16x1xi32>
    %113 = vector.broadcast %112 : vector<16x1xi32> to vector<16x128xi32>
    %114 = arith.cmpi eq, %9, %113 : vector<16x128xi32>
    %cst_36 = arith.constant 0xFF800000 : f32
    %115 = vector.broadcast %cst_36 : f32 to vector<16x128xf32>
    %116 = arith.select %114, %115, %102 : vector<16x128xi1>, vector<16x128xf32>
    %cst_37 = arith.constant dense<0xFF800000> : vector<16xf32>
    %117 = vector.multi_reduction <maximumf>, %116, %cst_37 [1] : vector<16x128xf32> to vector<16xf32>
    %118 = vector.shape_cast %117 : vector<16xf32> to vector<16x1xf32>
    %119 = arith.addf %106, %118 : vector<16x1xf32>
    %120 = vector.broadcast %118 : vector<16x1xf32> to vector<16x128xf32>
    %121 = arith.cmpf oeq, %116, %120 : vector<16x128xf32>
    %c128_i32_38 = arith.constant 128 : i32
    %122 = vector.broadcast %c128_i32_38 : i32 to vector<16x128xi32>
    %123 = arith.select %121, %9, %122 : vector<16x128xi1>, vector<16x128xi32>
    %cst_39 = arith.constant dense<2147483647> : vector<16xi32>
    %124 = vector.multi_reduction <minsi>, %123, %cst_39 [1] : vector<16x128xi32> to vector<16xi32>
    %125 = vector.shape_cast %124 : vector<16xi32> to vector<16x1xi32>
    %126 = vector.broadcast %125 : vector<16x1xi32> to vector<16x128xi32>
    %127 = arith.cmpi eq, %9, %126 : vector<16x128xi32>
    %cst_40 = arith.constant 0xFF800000 : f32
    %128 = vector.broadcast %cst_40 : f32 to vector<16x128xf32>
    %129 = arith.select %127, %128, %116 : vector<16x128xi1>, vector<16x128xf32>
    %cst_41 = arith.constant dense<0xFF800000> : vector<16xf32>
    %130 = vector.multi_reduction <maximumf>, %129, %cst_41 [1] : vector<16x128xf32> to vector<16xf32>
    %131 = vector.shape_cast %130 : vector<16xf32> to vector<16x1xf32>
    %132 = arith.addf %119, %131 : vector<16x1xf32>
    %c2_i32 = arith.constant 2 : i32
    %133 = vector.broadcast %c2_i32 : i32 to vector<16x3xi32>
    %134 = arith.cmpi eq, %10, %133 : vector<16x3xi32>
    %cst_42 = arith.constant 0.000000e+00 : f32
    %135 = vector.shape_cast %132 : vector<16x1xf32> to vector<16x1xf32>
    %136 = vector.broadcast %135 : vector<16x1xf32> to vector<16x3xf32>
    %137 = vector.broadcast %cst_42 : f32 to vector<16x3xf32>
    %138 = arith.select %134, %136, %137 : vector<16x3xi1>, vector<16x3xf32>
    %139 = arith.addf %97, %138 : vector<16x3xf32>
    %cst_43 = arith.constant dense<0.000000e+00> : vector<3xf32>
    %140 = vector.multi_reduction <add>, %139, %cst_43 [0] : vector<16x3xf32> to vector<3xf32>
    %141 = vector.shape_cast %140 : vector<3xf32> to vector<1x3xf32>
    %c0_44 = arith.constant 0 : index
    %c0_45 = arith.constant 0 : index
    %c0_46 = arith.constant 0 : index
    %142 = vector.load %arg3[%c0_44, %c0_45, %c0_46] : memref<1x1x3xf32, #tpu.memory_space<vmem>>, vector<1x1x3xf32>
    %143 = vector.shape_cast %142 : vector<1x1x3xf32> to vector<1x3xf32>
    %144 = vector.shape_cast %141 : vector<1x3xf32> to vector<1x1x3xf32>
    tpu.vector_store %arg3[%c0_44, %c0_45, %c0_46], %144 {strides = array<i32>} : memref<1x1x3xf32, #tpu.memory_space<vmem>>, vector<1x1x3xf32>,
    return
  }
  func.func @transform_0(%arg0: i32) -> (i32, i32, i32) {
    %c0_i32 = arith.constant 0 : i32
    %c0_i32_0 = arith.constant 0 : i32
    %c0_i32_1 = arith.constant 0 : i32
    return %arg0, %c0_i32, %c0_i32_0 : i32, i32, i32
  }
  func.func @transform_1(%arg0: i32) -> (i32, i32) {
    %c0_i32 = arith.constant 0 : i32
    %c0_i32_0 = arith.constant 0 : i32
    %c0_i32_1 = arith.constant 0 : i32
    return %c0_i32, %c0_i32_0 : i32, i32
  }
  func.func @transform_2(%arg0: i32) -> (i32, i32, i32) {
    %c0_i32 = arith.constant 0 : i32
    %c0_i32_0 = arith.constant 0 : i32
    %c0_i32_1 = arith.constant 0 : i32
    return %arg0, %c0_i32, %c0_i32_0 : i32, i32, i32
  }
}

</mosaic_0001>

<llo_original>
// kernel: tpu_custom_call.1
$region0: #{tpu_custom_call.1}
  #allocation0 [shape = 'u32[]', space=smem, size = 0x4, offset = 0x4, fixed_abs, tag = 'smem constant byte address 0x4 - core index']
  #allocation1 [shape = 'u32[144,128]{1,0:T(1,128)}', space=vmem, size = 0x12000, scoped, tag = 'internal scratch']
  %s0 = inlined_call_operand.hbm [shape: f32[2,16,32], index: 0, kind: input, shape index: {}]
  %s1 = inlined_call_operand.hbm [shape: bf16[32,384], index: 1, kind: input, shape index: {}]
  %s2 = inlined_call_operand.hbm [shape: f32[2,1,3], index: 2, kind: output, shape index: {}]
  %s3 = sld [smem:[#allocation0]]
  $region49: #{tpu_custom_call.1} parent=0
    _
  %s5 = ssub.s32 1, %s3
  %s6 = scalar_select 0, %s5, %s3
  $region1: #{tpu_custom_call.1} parent=0
    #allocation2 [shape = 'u8[16384]{0}', space=vmem, size = 0x4000, scoped, tag = 'input window, operand 0']
    #allocation3 [shape = 's32[2]{0}', space=sflag, size = 0x8, scoped, tag = 'scoped memory for tpu_custom_call.1']
    #allocation4 [shape = 's32[2]{0}', space=sflag, size = 0x8, scoped, tag = 'scoped memory for tpu_custom_call.1']
    #allocation5 [shape = 'u8[24576]{0}', space=vmem, size = 0x6000, scoped, tag = 'input window, operand 1, single buffered']
    #allocation6 [shape = 's32[1]{0}', space=sflag, size = 0x4, scoped, tag = 'scoped memory for tpu_custom_call.1']
    #allocation7 [shape = 'u8[1024]{0}', space=vmem, size = 0x400, scoped, tag = 'output window, operand 0']
    %7 = vsyncpa [#allocation3], 0
    %s8 = scalar_lea.sflag [#allocation3], 1
    %9 = vsyncpa %s8, 0
    %10 = vsyncpa [#allocation6], 0
    %11 = vsyncpa [#allocation4], 0
    %s12 = scalar_lea.sflag [#allocation4], 1
    %13 = vsyncpa %s12, 0
    loop: start=0, step=1, limit=4
    $region2: #{tpu_custom_call.1} parent=1 // loop_pre_header
      _
    $region3: #{tpu_custom_call.1} parent=1 // loop_header
      %s15 = sphi 0, %s19
      %p16 = scmp.ge.s32.totalorder %s15, 4
      %s25 = sphi 0, %s27
      %s28 = sphi 0, %s25
      %s29 = sphi 0, %s28
      %s45 = sphi 0, %s29
      %s49 = sphi 0, %s49
      %s51 = sphi 0, %s49
      %s52 = sphi 0, %s51
      %s66 = sphi 0, %s52
      %s72 = sphi 0, %s74
      %s75 = sphi 0, %s72
      %s76 = sphi 0, %s75
      %s92 = sphi 0, %s76
    $region4: #{tpu_custom_call.1} parent=1 // loop_header_branch
      %18 = sbr.rel (%p16) target = $region8
    $region5: #{tpu_custom_call.1} parent=1 // loop_body
      %s20 = ssub.s32 %s15, 1
      %s21 = ssub.s32 %s15, 2
      %s22 = sadd.s32 %s15, 1
      %s23 = ssub.s32 %s15, %s22
      %p24 = scmp.eq.s32.totalorder %s23, 0
      %s26 = sadd.s32 %s25, 1
      %s27 = scalar_select %p24, %s25, %s26
      %p30 = pneg %p24
      %p31 = scmp.eq.s32.totalorder %s15, 1
      %p32 = por %p30, %p31
      %p33 = scmp.ne.s32.totalorder %s25, %s28
      %p34 = scmp.eq.s32.totalorder %s15, 0
      %p35 = por %p33, %p34
      %p36 = scmp.ne.s32.totalorder %s25, %s28
      %p37 = scmp.eq.s32.totalorder %s20, 1
      %p38 = por %p36, %p37
      %p39 = scmp.ne.s32.totalorder %s28, %s29
      %p40 = scmp.eq.s32.totalorder %s20, 0
      %p41 = por %p39, %p40
      %p42 = scmp.ne.s32.totalorder %s28, %s29
      %p43 = scmp.eq.s32.totalorder %s21, 1
      %p44 = por %p42, %p43
      %p46 = scmp.ne.s32.totalorder %s29, %s45
      %p47 = scmp.eq.s32.totalorder %s21, 0
      %p48 = por %p46, %p47
      %s50 = sadd.s32 %s49, 1
      %p53 = scmp.eq.s32.totalorder %s15, 1
      %p54 = scmp.ne.s32.totalorder %s49, %s51
      %p55 = scmp.eq.s32.totalorder %s15, 0
      %p56 = por %p54, %p55
      %p57 = scmp.ne.s32.totalorder %s49, %s51
      %p58 = scmp.eq.s32.totalorder %s20, 1
      %p59 = por %p57, %p58
      %p60 = scmp.ne.s32.totalorder %s51, %s52
      %p61 = scmp.eq.s32.totalorder %s20, 0
      %p62 = por %p60, %p61
      %p63 = scmp.ne.s32.totalorder %s51, %s52
      %p64 = scmp.eq.s32.totalorder %s21, 1
      %p65 = por %p63, %p64
      %p67 = scmp.ne.s32.totalorder %s52, %s66
      %p68 = scmp.eq.s32.totalorder %s21, 0
      %p69 = por %p67, %p68
      %s70 = ssub.s32 %s15, %s22
      %p71 = scmp.eq.s32.totalorder %s70, 0
      %s73 = sadd.s32 %s72, 1
      %s74 = scalar_select %p71, %s72, %s73
      %p77 = pneg %p71
      %p78 = scmp.eq.s32.totalorder %s15, 1
      %p79 = por %p77, %p78
      %p80 = scmp.ne.s32.totalorder %s72, %s75
      %p81 = scmp.eq.s32.totalorder %s15, 0
      %p82 = por %p80, %p81
      %p83 = scmp.ne.s32.totalorder %s72, %s75
      %p84 = scmp.eq.s32.totalorder %s20, 1
      %p85 = por %p83, %p84
      %p86 = scmp.ne.s32.totalorder %s75, %s76
      %p87 = scmp.eq.s32.totalorder %s20, 0
      %p88 = por %p86, %p87
      %p89 = scmp.ne.s32.totalorder %s75, %s76
      %p90 = scmp.eq.s32.totalorder %s21, 1
      %p91 = por %p89, %p90
      %p93 = scmp.ne.s32.totalorder %s76, %s92
      %p94 = scmp.eq.s32.totalorder %s21, 0
      %p95 = por %p93, %p94
      %p96 = scmp.le.s32.totalorder 1, %s15
      %p97 = scmp.lt.s32.totalorder %s15, 3
      %p98 = pnand %p96, %p97
      %p99 = pneg %p98
      // Predicated region
      $region9: #{tpu_custom_call.1} parent=5 // pred_check
        _
      $region10: #{tpu_custom_call.1} parent=5 // pred_check_branch
        %101 = sbr.rel (%p98) target = $region12
      $region11: #{tpu_custom_call.1} parent=5 // pred_region
        %s102 = ssub.s32 %s15, 1
        // Predicated region
        $region13: #{tpu_custom_call.1} parent=11 // pred_check
          %p103 = pneg %p62
        $region14: #{tpu_custom_call.1} parent=11 // pred_check_branch
          %105 = sbr.rel (%p103) target = $region16
        $region15: #{tpu_custom_call.1} parent=11 // pred_region
          %s107 = ssub.s32 768, 768
          %108 = vsyncadd [#allocation6], %s107
          %s109 = sshll.u32 [#allocation5], 4
          %s110 = int_to_ptr.vmem [resolvable:$true] %s109
          %115 = dma.hbm_to_vmem [thread:$0]  %s1, 768, %s110, [#allocation6], 192, 192, 12
        $region16: #{tpu_custom_call.1} parent=11 // pred_fallthru
          _
      $region12: #{tpu_custom_call.1} parent=5 // pred_fallthru
        _
      %p116 = scmp.lt.s32.totalorder %s15, 2
      // Predicated region
      $region17: #{tpu_custom_call.1} parent=5 // pred_check
        %p117 = pneg %p116
      $region18: #{tpu_custom_call.1} parent=5 // pred_check_branch
        %119 = sbr.rel (%p117) target = $region20
      $region19: #{tpu_custom_call.1} parent=5 // pred_region
        // Predicated region
        $region21: #{tpu_custom_call.1} parent=19 // pred_check
          %p120 = pneg %p35
        $region22: #{tpu_custom_call.1} parent=19 // pred_check_branch
          %122 = sbr.rel (%p120) target = $region24
        $region23: #{tpu_custom_call.1} parent=19 // pred_region
          %s123 = sand.u32 %s25, 1
          %s124 = scalar_lea.sflag [#allocation3], %s123
          %s125 = sand.u32 %s25, 1
          %s126 = smul.addr %s125, 16
          %s127 = scalar_lea.vmem [#allocation2], %s126
          %s129 = ssub.s32 256, 256
          %130 = vsyncadd %s124, %s129
          %s131 = smul.addr %s15, 2
          %s132 = smul.addr %s131, 128
          %s133 = scalar_lea.hbm %s0, %s132
          %s134 = sshll.u32 %s127, 4
          %s135 = int_to_ptr.vmem [resolvable:$true] %s134
          %140 = dma.hbm_to_vmem [thread:$0]  %s133, 256, %s135, %s124, 128, 128, 8
        $region24: #{tpu_custom_call.1} parent=19 // pred_fallthru
          _
      $region20: #{tpu_custom_call.1} parent=5 // pred_fallthru
        _
      %p141 = scmp.le.s32.totalorder 1, %s15
      %p142 = scmp.lt.s32.totalorder %s15, 3
      %p143 = pnand %p141, %p142
      %p144 = pneg %p143
      // Predicated region
      $region25: #{tpu_custom_call.1} parent=5 // pred_check
        _
      $region26: #{tpu_custom_call.1} parent=5 // pred_check_branch
        %146 = sbr.rel (%p143) target = $region28
      $region27: #{tpu_custom_call.1} parent=5 // pred_region
        %s147 = ssub.s32 %s15, 1
        %s148 = sand.u32 %s28, 1
        %s149 = scalar_lea.sflag [#allocation3], %s148
        %s150 = sand.u32 %s28, 1
        %s151 = smul.addr %s150, 16
        %s152 = scalar_lea.vmem [#allocation2], %s151
        // Predicated region
        $region29: #{tpu_custom_call.1} parent=27 // pred_check
          %p153 = pneg %p41
        $region30: #{tpu_custom_call.1} parent=27 // pred_check_branch
          %155 = sbr.rel (%p153) target = $region32
        $region31: #{tpu_custom_call.1} parent=27 // pred_region
          %156 = dma.done %s149, 256
        $region32: #{tpu_custom_call.1} parent=27 // pred_fallthru
          _
        // Predicated region
        $region33: #{tpu_custom_call.1} parent=27 // pred_check
          %p157 = pneg %p62
        $region34: #{tpu_custom_call.1} parent=27 // pred_check_branch
          %159 = sbr.rel (%p157) target = $region36
        $region35: #{tpu_custom_call.1} parent=27 // pred_region
          %160 = dma.done [#allocation6], 768
        $region36: #{tpu_custom_call.1} parent=27 // pred_fallthru
          _
        %s161 = sand.u32 %s28, 1
        %s162 = scalar_lea.sflag [#allocation3], %s161
        %s163 = sand.u32 %s28, 1
        %s164 = smul.addr %s163, 16
        %s165 = scalar_lea.vmem [#allocation2], %s164
        %p166 = pneg %p41
        %p167 = pneg %p38
        %p168 = pneg %p62
        %p169 = pneg %p59
        %p170 = pneg %p88
        %p171 = pneg %p85
        %s172 = sand.u32 %s75, 1
        %s173 = scalar_lea.sflag [#allocation4], %s172
        %s174 = sand.u32 %s75, 1
        %s175 = scalar_lea.vmem [#allocation7], %s174
        %v177 = vld [vmem:[%s152] sm:$0xff]
        %v178 = vld [vmem:[%s152 + $0x8] sm:$0xff]
        %v179 = vmul.f32 %v177, %v177
        %v180 = vmul.f32 %v178, %v178
        %vm181 = vcmask 261120
        %v182 = vsel %vm181, %v179, 0.0
        %183 = vadd.xlane.f32.xlu0 %v182
        %v184 = vpop.xlane.xlu0 %183
        %v185 = vsel %vm181, %v180, 0.0
        %186 = vadd.xlane.f32.xlu0 %v185
        %v187 = vpop.xlane.xlu0 %186
        %v188 = vrsqrt.pop %v184
        %v189 = vrsqrt.pop %v187
        %v190 = vmul.f32 %v177, %v188
        %v191 = vmul.f32 %v178, %v189
        %v192 = vpack.c.bf16 %v191, %v190
        %v193 = vlaneseq
        %v194 = vand.u32 %v193, 127
        %v195 = vld [vmem:[#allocation5] sm:$0xff]
        %v196 = vld [vmem:[#allocation5 + $0x8] sm:$0xf]
        %v197 = vld [vmem:[#allocation5 + $0xc] sm:$0xff]
        %v198 = vld [vmem:[#allocation5 + $0x14] sm:$0xf]
        %v199 = vld [vmem:[#allocation5 + $0x18] sm:$0xff]
        %v200 = vld [vmem:[#allocation5 + $0x20] sm:$0xf]
        %v201 = vld [vmem:[#allocation5 + $0x24] sm:$0xff]
        %v202 = vld [vmem:[#allocation5 + $0x2c] sm:$0xf]
        %v211 = vunpack.c.l.b16 %v195
        %v212 = vunpack.c.h.b16 %v195
        %v213 = vunpack.c.l.b16 %v196
        %v214 = vunpack.c.l.b16 %v197
        %v215 = vunpack.c.h.b16 %v197
        %v216 = vunpack.c.l.b16 %v198
        %v217 = vunpack.c.l.b16 %v199
        %v218 = vunpack.c.h.b16 %v199
        %v219 = vunpack.c.l.b16 %v200
        %v220 = vunpack.c.l.b16 %v201
        %v221 = vunpack.c.h.b16 %v201
        %v222 = vunpack.c.l.b16 %v202
        %v223 = vpack.c.b16 %v214, %v211
        %v224 = vpack.c.b16 %v215, %v212
        %v225 = vpack.c.b16 %v216, %v213
        %v226 = vpack.c.b16 %v220, %v217
        %v227 = vpack.c.b16 %v221, %v218
        %v228 = vpack.c.b16 %v222, %v219
        %v236 = vsel %vm181, %v192, 0
        %238 = vmatprep.subr.bf16.mxu0 %v224
        %239 = vmatpush1.bf16.msra.mxu0 %v223
        %240 = vmatprep.subr.bf16.mxu0 %v227
        %241 = vmatpush1.bf16.msra.mxu0 %v226
        %242 = vmatprep.subr.bf16.mxu0 0
        %243 = vmatpush1.bf16.msra.mxu0 0
        %244 = vmatprep.subr.bf16.mxu0 0
        %245 = vmatpush1.bf16.msra.mxu0 0
        %246 = vmatprep.subr.bf16.mxu0 0
        %247 = vmatpush1.bf16.msra.mxu0 0
        %248 = vmatprep.subr.bf16.mxu0 0
        %249 = vmatpush1.bf16.msra.mxu0 0
        %250 = vmatprep.subr.bf16.mxu0 0
        %251 = vmatpush1.bf16.msra.mxu0 0
        %252 = vmatprep.subr.bf16.mxu0 0
        %253 = vmatpush1.bf16.msra.mxu0 0
        %254 = vmatprep.subr.bf16.mxu0 0
        %255 = vmatpush1.bf16.msra.mxu0 0
        %256 = vmatprep.subr.bf16.mxu0 0
        %257 = vmatpush1.bf16.msra.mxu0 0
        %258 = vmatprep.subr.bf16.mxu0 0
        %259 = vmatpush1.bf16.msra.mxu0 0
        %260 = vmatprep.subr.bf16.mxu0 0
        %261 = vmatpush1.bf16.msra.mxu0 0
        %262 = vmatprep.subr.bf16.mxu0 0
        %263 = vmatpush1.bf16.msra.mxu0 0
        %264 = vmatprep.subr.bf16.mxu0 0
        %265 = vmatpush1.bf16.msra.mxu0 0
        %266 = vmatprep.subr.bf16.mxu0 0
        %267 = vmatpush1.bf16.msra.mxu0 0
        %268 = vmatprep.subr.bf16.mxu0 0
        %269 = vmatpush1.bf16.msra.mxu0 0
        %270 = vmatprep.mubr.bf16.mxu0 0
        %271 = vmatmul.mubr.bf16.gmra.mrb[0].mxu0 %v236
        %v272 = vpop.f32.mrb[0].mxu0
        %v273 = vadd.f32 0.0, %v272
        %v274 = vpop.f32.mrb[0].mxu0
        %v275 = vadd.f32 0.0, %v274
        %v276 = vpop.f32.mrb[0].mxu0
        %v277 = vadd.f32 0.0, %v276
        %v278 = vpop.f32.mrb[0].mxu0
        %v279 = vadd.f32 0.0, %v278
        %280 = vdwg.mxu0
        %281 = vmatprep.subr.bf16.mxu0 0
        %282 = vmatpush1.bf16.msra.mxu0 %v225
        %283 = vmatprep.subr.bf16.mxu0 0
        %284 = vmatpush1.bf16.msra.mxu0 %v228
        %285 = vmatprep.subr.bf16.mxu0 0
        %286 = vmatpush1.bf16.msra.mxu0 0
        %287 = vmatprep.subr.bf16.mxu0 0
        %288 = vmatpush1.bf16.msra.mxu0 0
        %289 = vmatprep.subr.bf16.mxu0 0
        %290 = vmatpush1.bf16.msra.mxu0 0
        %291 = vmatprep.subr.bf16.mxu0 0
        %292 = vmatpush1.bf16.msra.mxu0 0
        %293 = vmatprep.subr.bf16.mxu0 0
        %294 = vmatpush1.bf16.msra.mxu0 0
        %295 = vmatprep.subr.bf16.mxu0 0
        %296 = vmatpush1.bf16.msra.mxu0 0
        %297 = vmatprep.subr.bf16.mxu0 0
        %298 = vmatpush1.bf16.msra.mxu0 0
        %299 = vmatprep.subr.bf16.mxu0 0
        %300 = vmatpush1.bf16.msra.mxu0 0
        %301 = vmatprep.subr.bf16.mxu0 0
        %302 = vmatpush1.bf16.msra.mxu0 0
        %303 = vmatprep.subr.bf16.mxu0 0
        %304 = vmatpush1.bf16.msra.mxu0 0
        %305 = vmatprep.subr.bf16.mxu0 0
        %306 = vmatpush1.bf16.msra.mxu0 0
        %307 = vmatprep.subr.bf16.mxu0 0
        %308 = vmatpush1.bf16.msra.mxu0 0
        %309 = vmatprep.subr.bf16.mxu0 0
        %310 = vmatpush1.bf16.msra.mxu0 0
        %311 = vmatprep.subr.bf16.mxu0 0
        %312 = vmatpush1.bf16.msra.mxu0 0
        %313 = vmatprep.mubr.bf16.mxu0 0
        %314 = vmatmul.mubr.bf16.gmra.mrb[0].mxu0 %v236
        %v315 = vpop.f32.mrb[0].mxu0
        %v316 = vadd.f32 0.0, %v315
        %v317 = vpop.f32.mrb[0].mxu0
        %v318 = vpop.f32.mrb[0].mxu0
        %v319 = vadd.f32 0.0, %v318
        %v320 = vpop.f32.mrb[0].mxu0
        %321 = vdwg.mxu0
        %vm322 = vcmp.ge.s32.totalorder %v194, 32
        %v323 = vsel %vm322, -inf, %v273
        %v324 = vsel %vm322, -inf, %v277
        %325 = vmax.xlane.f32.xlu0 %v323
        %v326 = vpop.xlane.xlu0 %325
        %327 = vmax.xlane.f32.xlu0 %v324
        %v328 = vpop.xlane.xlu0 %327
        %v329 = vadd.f32 %v326, 0.0
        %v330 = vadd.f32 %v328, 0.0
        %vm331 = vcmp.eq.f32.partialorder %v323, %v326
        %vm332 = vcmp.eq.f32.partialorder %v324, %v328
        %v333 = vsel %vm331, %v194, 128
        %v334 = vsel %vm332, %v194, 128
        %v335 = vand.u32 %v333, 65535
        %v336 = vshra.s32 %v333, 16
        %v337 = vcvt.s32.f32 %v335
        %v338 = vcvt.s32.f32 %v336
        %339 = vmin.xlane.f32.xlu0 %v338
        %v340 = vpop.xlane.xlu0 %339
        %vm341 = vcmp.eq.f32.partialorder %v338, %v340
        %v342 = vsel %vm341, %v337, inf
        %343 = vmin.xlane.f32.xlu0 %v342
        %v344 = vpop.xlane.xlu0 %343
        %v345 = vcvt.f32.s32 %v344
        %v346 = vcvt.f32.s32 %v340
        %v347 = vshll.u32 %v346, 16
        %v348 = vadd.s32 %v347, %v345
        %v349 = vand.u32 %v334, 65535
        %v350 = vshra.s32 %v334, 16
        %v351 = vcvt.s32.f32 %v349
        %v352 = vcvt.s32.f32 %v350
        %353 = vmin.xlane.f32.xlu0 %v352
        %v354 = vpop.xlane.xlu0 %353
        %vm355 = vcmp.eq.f32.partialorder %v352, %v354
        %v356 = vsel %vm355, %v351, inf
        %357 = vmin.xlane.f32.xlu0 %v356
        %v358 = vpop.xlane.xlu0 %357
        %v359 = vcvt.f32.s32 %v358
        %v360 = vcvt.f32.s32 %v354
        %v361 = vshll.u32 %v360, 16
        %v362 = vadd.s32 %v361, %v359
        %vm363 = vcmp.eq.s32.totalorder %v194, %v348
        %vm364 = vcmp.eq.s32.totalorder %v194, %v362
        %v365 = vsel %vm363, -inf, %v323
        %v366 = vsel %vm364, -inf, %v324
        %367 = vmax.xlane.f32.xlu0 %v365
        %v368 = vpop.xlane.xlu0 %367
        %369 = vmax.xlane.f32.xlu0 %v366
        %v370 = vpop.xlane.xlu0 %369
        %v371 = vadd.f32 %v329, %v368
        %v372 = vadd.f32 %v330, %v370
        %vm373 = vcmp.eq.f32.partialorder %v365, %v368
        %vm374 = vcmp.eq.f32.partialorder %v366, %v370
        %v375 = vsel %vm373, %v194, 128
        %v376 = vsel %vm374, %v194, 128
        %v377 = vand.u32 %v375, 65535
        %v378 = vshra.s32 %v375, 16
        %v379 = vcvt.s32.f32 %v377
        %v380 = vcvt.s32.f32 %v378
        %381 = vmin.xlane.f32.xlu0 %v380
        %v382 = vpop.xlane.xlu0 %381
        %vm383 = vcmp.eq.f32.partialorder %v380, %v382
        %v384 = vsel %vm383, %v379, inf
        %385 = vmin.xlane.f32.xlu0 %v384
        %v386 = vpop.xlane.xlu0 %385
        %v387 = vcvt.f32.s32 %v386
        %v388 = vcvt.f32.s32 %v382
        %v389 = vshll.u32 %v388, 16
        %v390 = vadd.s32 %v389, %v387
        %v391 = vand.u32 %v376, 65535
        %v392 = vshra.s32 %v376, 16
        %v393 = vcvt.s32.f32 %v391
        %v394 = vcvt.s32.f32 %v392
        %395 = vmin.xlane.f32.xlu0 %v394
        %v396 = vpop.xlane.xlu0 %395
        %vm397 = vcmp.eq.f32.partialorder %v394, %v396
        %v398 = vsel %vm397, %v393, inf
        %399 = vmin.xlane.f32.xlu0 %v398
        %v400 = vpop.xlane.xlu0 %399
        %v401 = vcvt.f32.s32 %v400
        %v402 = vcvt.f32.s32 %v396
        %v403 = vshll.u32 %v402, 16
        %v404 = vadd.s32 %v403, %v401
        %vm405 = vcmp.eq.s32.totalorder %v194, %v390
        %vm406 = vcmp.eq.s32.totalorder %v194, %v404
        %v407 = vsel %vm405, -inf, %v365
        %v408 = vsel %vm406, -inf, %v366
        %409 = vmax.xlane.f32.xlu0 %v407
        %v410 = vpop.xlane.xlu0 %409
        %411 = vmax.xlane.f32.xlu0 %v408
        %v412 = vpop.xlane.xlu0 %411
        %v413 = vadd.f32 %v371, %v410
        %v414 = vadd.f32 %v372, %v412
        %vm415 = vcmp.eq.s32.totalorder %v194, 0
        %v416 = vsel %vm415, %v413, 0.0
        %v417 = vsel %vm415, %v414, 0.0
        %v418 = vadd.f32 %v416, 0.0
        %v419 = vadd.f32 %v417, 0.0
        %v420 = vsel %vm322, -inf, %v275
        %v421 = vsel %vm322, -inf, %v279
        %422 = vmax.xlane.f32.xlu0 %v420
        %v423 = vpop.xlane.xlu0 %422
        %424 = vmax.xlane.f32.xlu0 %v421
        %v425 = vpop.xlane.xlu0 %424
        %v426 = vadd.f32 %v423, 0.0
        %v427 = vadd.f32 %v425, 0.0
        %vm428 = vcmp.eq.f32.partialorder %v420, %v423
        %vm429 = vcmp.eq.f32.partialorder %v421, %v425
        %v430 = vsel %vm428, %v194, 128
        %v431 = vsel %vm429, %v194, 128
        %v432 = vand.u32 %v430, 65535
        %v433 = vshra.s32 %v430, 16
        %v434 = vcvt.s32.f32 %v432
        %v435 = vcvt.s32.f32 %v433
        %436 = vmin.xlane.f32.xlu0 %v435
        %v437 = vpop.xlane.xlu0 %436
        %vm438 = vcmp.eq.f32.partialorder %v435, %v437
        %v439 = vsel %vm438, %v434, inf
        %440 = vmin.xlane.f32.xlu0 %v439
        %v441 = vpop.xlane.xlu0 %440
        %v442 = vcvt.f32.s32 %v441
        %v443 = vcvt.f32.s32 %v437
        %v444 = vshll.u32 %v443, 16
        %v445 = vadd.s32 %v444, %v442
        %v446 = vand.u32 %v431, 65535
        %v447 = vshra.s32 %v431, 16
        %v448 = vcvt.s32.f32 %v446
        %v449 = vcvt.s32.f32 %v447
        %450 = vmin.xlane.f32.xlu0 %v449
        %v451 = vpop.xlane.xlu0 %450
        %vm452 = vcmp.eq.f32.partialorder %v449, %v451
        %v453 = vsel %vm452, %v448, inf
        %454 = vmin.xlane.f32.xlu0 %v453
        %v455 = vpop.xlane.xlu0 %454
        %v456 = vcvt.f32.s32 %v455
        %v457 = vcvt.f32.s32 %v451
        %v458 = vshll.u32 %v457, 16
        %v459 = vadd.s32 %v458, %v456
        %vm460 = vcmp.eq.s32.totalorder %v194, %v445
        %vm461 = vcmp.eq.s32.totalorder %v194, %v459
        %v462 = vsel %vm460, -inf, %v420
        %v463 = vsel %vm461, -inf, %v421
        %464 = vmax.xlane.f32.xlu0 %v462
        %v465 = vpop.xlane.xlu0 %464
        %466 = vmax.xlane.f32.xlu0 %v463
        %v467 = vpop.xlane.xlu0 %466
        %v468 = vadd.f32 %v426, %v465
        %v469 = vadd.f32 %v427, %v467
        %vm470 = vcmp.eq.f32.partialorder %v462, %v465
        %vm471 = vcmp.eq.f32.partialorder %v463, %v467
        %v472 = vsel %vm470, %v194, 128
        %v473 = vsel %vm471, %v194, 128
        %v474 = vand.u32 %v472, 65535
        %v475 = vshra.s32 %v472, 16
        %v476 = vcvt.s32.f32 %v474
        %v477 = vcvt.s32.f32 %v475
        %478 = vmin.xlane.f32.xlu0 %v477
        %v479 = vpop.xlane.xlu0 %478
        %vm480 = vcmp.eq.f32.partialorder %v477, %v479
        %v481 = vsel %vm480, %v476, inf
        %482 = vmin.xlane.f32.xlu0 %v481
        %v483 = vpop.xlane.xlu0 %482
        %v484 = vcvt.f32.s32 %v483
        %v485 = vcvt.f32.s32 %v479
        %v486 = vshll.u32 %v485, 16
        %v487 = vadd.s32 %v486, %v484
        %v488 = vand.u32 %v473, 65535
        %v489 = vshra.s32 %v473, 16
        %v490 = vcvt.s32.f32 %v488
        %v491 = vcvt.s32.f32 %v489
        %492 = vmin.xlane.f32.xlu0 %v491
        %v493 = vpop.xlane.xlu0 %492
        %vm494 = vcmp.eq.f32.partialorder %v491, %v493
        %v495 = vsel %vm494, %v490, inf
        %496 = vmin.xlane.f32.xlu0 %v495
        %v497 = vpop.xlane.xlu0 %496
        %v498 = vcvt.f32.s32 %v497
        %v499 = vcvt.f32.s32 %v493
        %v500 = vshll.u32 %v499, 16
        %v501 = vadd.s32 %v500, %v498
        %vm502 = vcmp.eq.s32.totalorder %v194, %v487
        %vm503 = vcmp.eq.s32.totalorder %v194, %v501
        %v504 = vsel %vm502, -inf, %v462
        %v505 = vsel %vm503, -inf, %v463
        %506 = vmax.xlane.f32.xlu0 %v504
        %v507 = vpop.xlane.xlu0 %506
        %508 = vmax.xlane.f32.xlu0 %v505
        %v509 = vpop.xlane.xlu0 %508
        %v510 = vadd.f32 %v468, %v507
        %v511 = vadd.f32 %v469, %v509
        %vm512 = vcmp.eq.s32.totalorder %v194, 1
        %v513 = vsel %vm512, %v510, 0.0
        %v514 = vsel %vm512, %v511, 0.0
        %v515 = vadd.f32 %v418, %v513
        %v516 = vadd.f32 %v419, %v514
        %v517 = vsel %vm322, -inf, %v316
        %v518 = vsel %vm322, -inf, %v319
        %519 = vmax.xlane.f32.xlu0 %v517
        %v520 = vpop.xlane.xlu0 %519
        %521 = vmax.xlane.f32.xlu0 %v518
        %v522 = vpop.xlane.xlu0 %521
        %v523 = vadd.f32 %v520, 0.0
        %v524 = vadd.f32 %v522, 0.0
        %vm525 = vcmp.eq.f32.partialorder %v517, %v520
        %vm526 = vcmp.eq.f32.partialorder %v518, %v522
        %v527 = vsel %vm525, %v194, 128
        %v528 = vsel %vm526, %v194, 128
        %v529 = vand.u32 %v527, 65535
        %v530 = vshra.s32 %v527, 16
        %v531 = vcvt.s32.f32 %v529
        %v532 = vcvt.s32.f32 %v530
        %533 = vmin.xlane.f32.xlu0 %v532
        %v534 = vpop.xlane.xlu0 %533
        %vm535 = vcmp.eq.f32.partialorder %v532, %v534
        %v536 = vsel %vm535, %v531, inf
        %537 = vmin.xlane.f32.xlu0 %v536
        %v538 = vpop.xlane.xlu0 %537
        %v539 = vcvt.f32.s32 %v538
        %v540 = vcvt.f32.s32 %v534
        %v541 = vshll.u32 %v540, 16
        %v542 = vadd.s32 %v541, %v539
        %v543 = vand.u32 %v528, 65535
        %v544 = vshra.s32 %v528, 16
        %v545 = vcvt.s32.f32 %v543
        %v546 = vcvt.s32.f32 %v544
        %547 = vmin.xlane.f32.xlu0 %v546
        %v548 = vpop.xlane.xlu0 %547
        %vm549 = vcmp.eq.f32.partialorder %v546, %v548
        %v550 = vsel %vm549, %v545, inf
        %551 = vmin.xlane.f32.xlu0 %v550
        %v552 = vpop.xlane.xlu0 %551
        %v553 = vcvt.f32.s32 %v552
        %v554 = vcvt.f32.s32 %v548
        %v555 = vshll.u32 %v554, 16
        %v556 = vadd.s32 %v555, %v553
        %vm557 = vcmp.eq.s32.totalorder %v194, %v542
        %vm558 = vcmp.eq.s32.totalorder %v194, %v556
        %v559 = vsel %vm557, -inf, %v517
        %v560 = vsel %vm558, -inf, %v518
        %561 = vmax.xlane.f32.xlu0 %v559
        %v562 = vpop.xlane.xlu0 %561
        %563 = vmax.xlane.f32.xlu0 %v560
        %v564 = vpop.xlane.xlu0 %563
        %v565 = vadd.f32 %v523, %v562
        %v566 = vadd.f32 %v524, %v564
        %vm567 = vcmp.eq.f32.partialorder %v559, %v562
        %vm568 = vcmp.eq.f32.partialorder %v560, %v564
        %v569 = vsel %vm567, %v194, 128
        %v570 = vsel %vm568, %v194, 128
        %v571 = vand.u32 %v569, 65535
        %v572 = vshra.s32 %v569, 16
        %v573 = vcvt.s32.f32 %v571
        %v574 = vcvt.s32.f32 %v572
        %575 = vmin.xlane.f32.xlu0 %v574
        %v576 = vpop.xlane.xlu0 %575
        %vm577 = vcmp.eq.f32.partialorder %v574, %v576
        %v578 = vsel %vm577, %v573, inf
        %579 = vmin.xlane.f32.xlu0 %v578
        %v580 = vpop.xlane.xlu0 %579
        %v581 = vcvt.f32.s32 %v580
        %v582 = vcvt.f32.s32 %v576
        %v583 = vshll.u32 %v582, 16
        %v584 = vadd.s32 %v583, %v581
        %v585 = vand.u32 %v570, 65535
        %v586 = vshra.s32 %v570, 16
        %v587 = vcvt.s32.f32 %v585
        %v588 = vcvt.s32.f32 %v586
        %589 = vmin.xlane.f32.xlu0 %v588
        %v590 = vpop.xlane.xlu0 %589
        %vm591 = vcmp.eq.f32.partialorder %v588, %v590
        %v592 = vsel %vm591, %v587, inf
        %593 = vmin.xlane.f32.xlu0 %v592
        %v594 = vpop.xlane.xlu0 %593
        %v595 = vcvt.f32.s32 %v594
        %v596 = vcvt.f32.s32 %v590
        %v597 = vshll.u32 %v596, 16
        %v598 = vadd.s32 %v597, %v595
        %vm599 = vcmp.eq.s32.totalorder %v194, %v584
        %vm600 = vcmp.eq.s32.totalorder %v194, %v598
        %v601 = vsel %vm599, -inf, %v559
        %v602 = vsel %vm600, -inf, %v560
        %603 = vmax.xlane.f32.xlu0 %v601
        %v604 = vpop.xlane.xlu0 %603
        %605 = vmax.xlane.f32.xlu0 %v602
        %v606 = vpop.xlane.xlu0 %605
        %v607 = vadd.f32 %v565, %v604
        %v608 = vadd.f32 %v566, %v606
        %vm609 = vcmp.eq.s32.totalorder %v194, 2
        %v610 = vsel %vm609, %v607, 0.0
        %v611 = vsel %vm609, %v608, 0.0
        %v612 = vadd.f32 %v515, %v610
        %v613 = vadd.f32 %v516, %v611
        %vm614 = vcmask 23552
        %v615 = vsel %vm614, %v612, 0.0
        %v616 = vsel %vm614, %v613, 0.0
        %v617 = vadd.f32 %v615, %v616
        %v618 = vrot.slane %v617, 4
        %v619 = vadd.f32 %v617, %v618
        %v620 = vrot.slane %v619, 2
        %v621 = vadd.f32 %v619, %v620
        %v622 = vrot.slane %v621, 1
        %v623 = vadd.f32 %v621, %v622
        %vm624 = vcmask 16384
        %625 = vst.msk [vmem:[%s175] sm:$0x1] %vm624, %v623
        %s626 = sand.u32 %s75, 1
        %s627 = scalar_lea.sflag [#allocation4], %s626
        %s628 = sand.u32 %s75, 1
        %s629 = scalar_lea.vmem [#allocation7], %s628
        // Predicated region
        $region37: #{tpu_custom_call.1} parent=27 // pred_check
          %p630 = pneg %p85
        $region38: #{tpu_custom_call.1} parent=27 // pred_check_branch
          %632 = sbr.rel (%p630) target = $region40
        $region39: #{tpu_custom_call.1} parent=27 // pred_region
          %s634 = ssub.s32 16, 16
          %635 = vsyncadd %s627, %s634
          %s636 = smul.addr %s20, 16
          %s637 = scalar_lea.hbm %s2, %s636
          %s639 = sshll.u32 %s629, 4
          %s640 = int_to_ptr.vmem [resolvable:$true] %s639
          %642 = dma.vmem_to_hbm [thread:$0]  %s640, 16, %s637, %s627
        $region40: #{tpu_custom_call.1} parent=27 // pred_fallthru
          _
      $region28: #{tpu_custom_call.1} parent=5 // pred_fallthru
        _
      %p643 = scmp.le.s32.totalorder 2, %s15
      // Predicated region
      $region41: #{tpu_custom_call.1} parent=5 // pred_check
        %p644 = pneg %p643
      $region42: #{tpu_custom_call.1} parent=5 // pred_check_branch
        %646 = sbr.rel (%p644) target = $region44
      $region43: #{tpu_custom_call.1} parent=5 // pred_region
        %s647 = ssub.s32 %s15, 2
        // Predicated region
        $region45: #{tpu_custom_call.1} parent=43 // pred_check
          %p648 = pneg %p91
        $region46: #{tpu_custom_call.1} parent=43 // pred_check_branch
          %650 = sbr.rel (%p648) target = $region48
        $region47: #{tpu_custom_call.1} parent=43 // pred_region
          %s651 = sand.u32 %s76, 1
          %s652 = scalar_lea.sflag [#allocation4], %s651
          %s653 = sand.u32 %s76, 1
          %s654 = scalar_lea.vmem [#allocation7], %s653
          %655 = dma.done %s652, 16
        $region48: #{tpu_custom_call.1} parent=43 // pred_fallthru
          _
      $region44: #{tpu_custom_call.1} parent=5 // pred_fallthru
        _
    $region6: #{tpu_custom_call.1} parent=1 // loop_footer
      %s19 = sadd.s32 1, %s15
    $region7: #{tpu_custom_call.1} parent=1 // loop_footer_branch
      %14 = sbr.rel target = $region3
    $region8: #{tpu_custom_call.1} parent=1 // loop_exit
      _
    %656 = vsyncpa [#allocation3], 1
    %s657 = scalar_lea.sflag [#allocation3], 1
    %658 = vsyncpa %s657, 1
    %659 = vsyncpa [#allocation6], 1
    %660 = vsyncpa [#allocation4], 1
    %s661 = scalar_lea.sflag [#allocation4], 1
    %662 = vsyncpa %s661, 1

</llo_original>
